<compile_context>
chip_gen: v5e
topology: v5e:2x2
jax: 0.10.0
libtpu: 0.0.40
codegen_flags: <defaults>
</compile_context>

<pallas_src>
import functools
import math

import jax
import jax.numpy as jnp
from jax.experimental import pallas as pl
from jax.experimental.pallas import tpu as pltpu

_LN10 = math.log(10.0)


def _c2h_kernel(coord_ref, o_ref, *, H, W, inv_denom):
    # coord_ref: (T, 2) with [:, 0] = x coords, [:, 1] = y coords.
    # o_ref:     (T, H*W) lane-dense, row-major flattening of the (H, W) map.
    xc = coord_ref[:, 0:1]                                   # (T, 1)
    yc = coord_ref[:, 1:2]                                   # (T, 1)

    # Synthesize the flattened grid in-kernel (no constant HBM inputs).
    # Flat pixel p = r*W + c.  Mirroring the PyTorch buffers (H == W assumed):
    #   grid_x[p] = (c + 0.5) / out_shape[0],  grid_y[p] = (r + 0.5) / out_shape[1]
    p = jax.lax.broadcasted_iota(jnp.int32, (1, H * W), 1)   # (1, HW)
    if W & (W - 1) == 0:                        # power-of-two width: shift/mask
        col = p & (W - 1)
        row = p >> (W.bit_length() - 1)
    else:                                       # general case
        row = p // W
        col = p - row * W
    xg = (col.astype(jnp.float32) + 0.5) * (1.0 / H)         # (1, HW)
    yg = (row.astype(jnp.float32) + 0.5) * (1.0 / W)         # (1, HW)

    dx = xg - xc                                             # (T, HW)
    dy = yg - yc                                             # (T, HW)
    # 10 * exp(-(dx^2 + dy^2)/denom)  ==  exp(-(dx^2 + dy^2)*inv_denom + ln10)
    o_ref[...] = jnp.exp((dx * dx + dy * dy) * (-inv_denom) + _LN10)


def _choose_tile_bc(bc, hw):
    """Heatmap rows per grid step.

    Single step for small problems (per-step pipeline overhead ~0.35us would
    dominate); otherwise ~4 MiB lane-dense f32 output blocks (HBM-write
    roofline, esp. v7x at 3.2 TB/s) with rows a multiple of 8 and an even step
    count so the 'parallel' axis splits evenly across v7x's two TensorCores.
    """
    bytes_per_row = hw * 4
    max_rows = max(8, ((4 << 20) // bytes_per_row) // 8 * 8)
    if bc <= max_rows:
        return bc                      # one step: do not split tiny problems
    n_steps = pl.cdiv(bc, max_rows)
    if n_steps % 2:
        n_steps += 1                   # even step count for the 2-TC case
    tile = ((pl.cdiv(bc, n_steps) + 7) // 8) * 8
    return max(8, min(tile, max_rows))


def coord2heatmap(coords, *, out_shape, num_class, denom):
    """coords: (B, 2*num_class) float32, interleaved as [x0, y0, x1, y1, ...]."""
    H, W = out_shape
    # The PyTorch buffer construction (meshgrid + assignment into an (H, W)
    # slab) only works for square out_shape; keep that contract explicit.
    assert H == W, "Coord2HeatmapNet's grid buffer construction assumes square out_shape"
    B = coords.shape[0]
    BC = B * num_class
    HW = H * W
    inv_denom = 1.0 / float(denom)

    # (B, 2C) interleaved [x0, y0, x1, y1, ...] -> (B*C, 2) rows of (x, y).
    xy = coords.astype(jnp.float32).reshape(BC, 2)

    tile = _choose_tile_bc(BC, HW)
    grid = (pl.cdiv(BC, tile),)

    kernel = functools.partial(_c2h_kernel, H=H, W=W, inv_denom=inv_denom)
    out_flat = pl.pallas_call(
        kernel,
        out_shape=jax.ShapeDtypeStruct((BC, HW), jnp.float32),
        grid=grid,
        in_specs=[pl.BlockSpec((tile, 2), lambda i: (i, 0))],
        out_specs=pl.BlockSpec((tile, HW), lambda i: (i, 0)),
        compiler_params=pltpu.CompilerParams(
            dimension_semantics=("parallel",),
            vmem_limit_bytes=32 * 1024 * 1024),
    )(xy)

    return out_flat.reshape(B, num_class, H, W)


def reference(coords, *, out_shape, denom):
    """Pure-JAX mirror of the PyTorch forward."""
    H, W = out_shape
    xs = jnp.linspace(0.5 / H, (H - 0.5) / H, H, dtype=jnp.float32)
    ys = jnp.linspace(0.5 / W, (W - 0.5) / W, W, dtype=jnp.float32)
    xg = jnp.broadcast_to(xs[None, :], (W, H))   # np.meshgrid(x, y) 'xy'
    yg = jnp.broadcast_to(ys[:, None], (W, H))
    xc = coords[:, 0::2][:, :, None, None]
    yc = coords[:, 1::2][:, :, None, None]
    d = ((xg - xc) ** 2 + (yg - yc) ** 2) / denom
    return 10.0 * jnp.exp(-d)


if __name__ == "__main__":
    # Module hyper-parameters (deterministic, in-script).
    out_shape = (16, 16)
    num_class = 4
    sigma_raw = 1.0
    sigma = sigma_raw / out_shape[1]
    denom = 2.0 * sigma ** 2
    # The grouped 1x1 conv weight is filled with 1.0 in __init__, so it reduces
    # to summing each class's (x, y) squared-diff pair; that sum is fused
    # directly into the single exponent inside the kernel.

    B = 2
    key = jax.random.PRNGKey(0)
    coords = jax.random.uniform(key, (B, num_class * 2), dtype=jnp.float32)

    out = coord2heatmap(coords, out_shape=out_shape, num_class=num_class,
                        denom=denom)
    out = jax.block_until_ready(out)

    ref = reference(coords, out_shape=out_shape, denom=denom)
    assert out.shape == (B, num_class, out_shape[0], out_shape[1])
    assert out.dtype == jnp.float32
    assert jnp.allclose(out, ref, rtol=1e-5, atol=1e-5)

    print("KERNEL_OK")
</pallas_src>

<mosaic_0001>
module attributes {stable_mosaic.version = 11 : i64} {
  func.func @_c2h_kernel(%arg0: i32, %arg1: memref<8x2xf32, #tpu.memory_space<vmem>>, %arg2: memref<8x256xf32, #tpu.memory_space<vmem>>) attributes {dimension_semantics = [#tpu.dimension_semantics<parallel>], iteration_bounds = array<i64: 1>, scalar_prefetch = 0 : i64, scratch_operands = 0 : i64, tpu.core_type = #tpu.core_type<tc>, window_params = [{transform_indices = @transform_0, window_bounds = array<i64: 8, 2>}, {transform_indices = @transform_1, window_bounds = array<i64: 8, 256>}]} {
    %c0 = arith.constant 0 : index
    %c0_0 = arith.constant 0 : index
    %0 = vector.load %arg1[%c0, %c0_0] : memref<8x2xf32, #tpu.memory_space<vmem>>, vector<8x1xf32>
    %c0_1 = arith.constant 0 : index
    %c1 = arith.constant 1 : index
    %1 = vector.load %arg1[%c0_1, %c1] : memref<8x2xf32, #tpu.memory_space<vmem>>, vector<8x1xf32>
    %2 = tpu.iota {dimensions = array<i32: 1>} : vector<1x256xi32>
    %c15_i32 = arith.constant 15 : i32
    %3 = vector.broadcast %c15_i32 : i32 to vector<1x256xi32>
    %4 = arith.andi %2, %3 : vector<1x256xi32>
    %c4_i32 = arith.constant 4 : i32
    %5 = vector.broadcast %c4_i32 : i32 to vector<1x256xi32>
    %6 = arith.shrsi %2, %5 : vector<1x256xi32>
    %7 = arith.sitofp %4 : vector<1x256xi32> to vector<1x256xf32>
    %cst = arith.constant 5.000000e-01 : f32
    %8 = vector.broadcast %cst : f32 to vector<1x256xf32>
    %9 = arith.addf %7, %8 : vector<1x256xf32>
    %cst_2 = arith.constant 6.250000e-02 : f32
    %10 = vector.broadcast %cst_2 : f32 to vector<1x256xf32>
    %11 = arith.mulf %9, %10 : vector<1x256xf32>
    %12 = arith.sitofp %6 : vector<1x256xi32> to vector<1x256xf32>
    %cst_3 = arith.constant 5.000000e-01 : f32
    %13 = vector.broadcast %cst_3 : f32 to vector<1x256xf32>
    %14 = arith.addf %12, %13 : vector<1x256xf32>
    %cst_4 = arith.constant 6.250000e-02 : f32
    %15 = vector.broadcast %cst_4 : f32 to vector<1x256xf32>
    %16 = arith.mulf %14, %15 : vector<1x256xf32>
    %17 = vector.broadcast %11 : vector<1x256xf32> to vector<8x256xf32>
    %18 = vector.broadcast %0 : vector<8x1xf32> to vector<8x256xf32>
    %19 = arith.subf %17, %18 : vector<8x256xf32>
    %20 = vector.broadcast %16 : vector<1x256xf32> to vector<8x256xf32>
    %21 = vector.broadcast %1 : vector<8x1xf32> to vector<8x256xf32>
    %22 = arith.subf %20, %21 : vector<8x256xf32>
    %23 = arith.mulf %19, %19 : vector<8x256xf32>
    %24 = arith.mulf %22, %22 : vector<8x256xf32>
    %25 = arith.addf %23, %24 : vector<8x256xf32>
    %cst_5 = arith.constant -1.280000e+02 : f32
    %26 = vector.broadcast %cst_5 : f32 to vector<8x256xf32>
    %27 = arith.mulf %25, %26 : vector<8x256xf32>
    %cst_6 = arith.constant 2.30258512 : f32
    %28 = vector.broadcast %cst_6 : f32 to vector<8x256xf32>
    %29 = arith.addf %27, %28 : vector<8x256xf32>
    %30 = math.exp %29 : vector<8x256xf32>
    %c0_7 = arith.constant 0 : index
    %c0_8 = arith.constant 0 : index
    %31 = vector.load %arg2[%c0_7, %c0_8] : memref<8x256xf32, #tpu.memory_space<vmem>>, vector<8x256xf32>
    tpu.vector_store %arg2[%c0_7, %c0_8], %30 {strides = array<i32>} : memref<8x256xf32, #tpu.memory_space<vmem>>, vector<8x256xf32>,
    return
  }
  func.func @transform_0(%arg0: i32) -> (i32, i32) {
    %c0_i32 = arith.constant 0 : i32
    %c0_i32_0 = arith.constant 0 : i32
    return %arg0, %c0_i32 : i32, i32
  }
  func.func @transform_1(%arg0: i32) -> (i32, i32) {
    %c0_i32 = arith.constant 0 : i32
    %c0_i32_0 = arith.constant 0 : i32
    return %arg0, %c0_i32 : i32, i32
  }
}

</mosaic_0001>

<llo_original>
// kernel: tpu_custom_call.1
$region0: #{tpu_custom_call.1}
  #allocation0 [shape = 'u32[]', space=smem, size = 0x4, offset = 0x4, fixed_abs, tag = 'smem constant byte address 0x4 - core index']
  #allocation1 [shape = 'u32[72,128]{1,0:T(1,128)}', space=vmem, size = 0x9000, scoped, tag = 'internal scratch']
  %s0 = inlined_call_operand.vmem [shape: f32[8,2], index: 0, kind: input, shape index: {}]
  %s1 = inlined_call_operand.hbm [shape: f32[8,256], index: 1, kind: output, shape index: {}]
  %s2 = sld [smem:[#allocation0]]
  $region14: #{tpu_custom_call.1} parent=0
    _
  %s4 = ssub.s32 1, %s2
  %s5 = scalar_select 0, %s4, %s2
  $region1: #{tpu_custom_call.1} parent=0
    #allocation2 [shape = 'u8[8192]{0}', space=vmem, size = 0x2000, scoped, tag = 'output window, operand 0, single buffered']
    #allocation3 [shape = 's32[1]{0}', space=sflag, size = 0x4, scoped, tag = 'scoped memory for tpu_custom_call.1']
    %6 = vsyncpa [#allocation3], 0
    // Predicated region
    $region2: #{tpu_custom_call.1} parent=1 // pred_check
      _
    $region3: #{tpu_custom_call.1} parent=1 // pred_check_branch
      %8 = sbr.rel (0) target = $region5
    $region4: #{tpu_custom_call.1} parent=1 // pred_region
      _
    $region5: #{tpu_custom_call.1} parent=1 // pred_fallthru
      _
    %v9 = vld [vmem:[%s0] sm:$0xff]
    %v10 = vlaneseq
    %v11 = vand.u32 %v10, 127
    %v12 = vadd.s32 %v11, 128
    %v13 = vand.u32 %v11, 15
    %v14 = vand.u32 %v12, 15
    %v15 = vshra.s32 %v11, 4
    %v16 = vshra.s32 %v12, 4
    %v17 = vcvt.s32.f32 %v13
    %v18 = vcvt.s32.f32 %v14
    %v19 = vadd.f32 %v17, 0.5
    %v20 = vadd.f32 %v18, 0.5
    %v21 = vmul.f32 %v19, 0.0625
    %v22 = vmul.f32 %v20, 0.0625
    %v23 = vcvt.s32.f32 %v15
    %v24 = vcvt.s32.f32 %v16
    %v25 = vadd.f32 %v23, 0.5
    %v26 = vadd.f32 %v24, 0.5
    %v27 = vmul.f32 %v25, 0.0625
    %v28 = vmul.f32 %v26, 0.0625
    %30 = vset.pattern.permute.xlu0 0
    %31 = vperm.xlu0 %30, %v9
    %v32 = vpop.permute.xlu0 %31
    %v34 = vsub.f32 %v21, %v32
    %v35 = vsub.f32 %v22, %v32
    %36 = vset.pattern.permute.xlu0 1
    %37 = vperm.xlu0 %36, %v9
    %v38 = vpop.permute.xlu0 %37
    %v40 = vsub.f32 %v27, %v38
    %v41 = vsub.f32 %v28, %v38
    %v42 = vmul.f32 %v34, %v34
    %v43 = vmul.f32 %v35, %v35
    %v44 = vmul.f32 %v40, %v40
    %v45 = vmul.f32 %v41, %v41
    %v46 = vadd.f32 %v42, %v44
    %v47 = vadd.f32 %v43, %v45
    %v48 = vmul.f32 %v46, -128.0
    %v49 = vmul.f32 %v47, -128.0
    %v50 = vadd.f32 %v48, 2.3025851
    %v51 = vadd.f32 %v49, 2.3025851
    %v52 = vmul.f32 %v50, 1.442695
    %v53 = vpow.pop %v52
    %v54 = vmul.f32 %v51, 1.442695
    %v55 = vpow.pop %v54
    %56 = vst [vmem:[#allocation2] sm:$0xff] %v53
    %57 = vst [vmem:[#allocation2 + $0x8] sm:$0xff] %v55
    // Predicated region
    $region6: #{tpu_custom_call.1} parent=1 // pred_check
      _
    $region7: #{tpu_custom_call.1} parent=1 // pred_check_branch
      %59 = sbr.rel (0) target = $region9
    $region8: #{tpu_custom_call.1} parent=1 // pred_region
      %61 = vsyncadd [#allocation3], 0
      %s63 = sshll.u32 [#allocation2], 4
      %s64 = int_to_ptr.vmem [resolvable:$true] %s63
      %s65 = sshll.u32 %s1, 4
      %s66 = int_to_ptr.hbm [resolvable:$true] %s65
      %68 = dma.vmem_to_hbm [thread:$0]  %s64, 256, %s66, [#allocation3]
    $region9: #{tpu_custom_call.1} parent=1 // pred_fallthru
      _
    // Predicated region
    $region10: #{tpu_custom_call.1} parent=1 // pred_check
      _
    $region11: #{tpu_custom_call.1} parent=1 // pred_check_branch
      %70 = sbr.rel (0) target = $region13
    $region12: #{tpu_custom_call.1} parent=1 // pred_region
      %72 = dma.done [#allocation3], 256
    $region13: #{tpu_custom_call.1} parent=1 // pred_fallthru
      _
    %73 = vsyncpa [#allocation3], 1

</llo_original>
